<compile_context>
chip_gen: v5e
topology: v5e:2x2
jax: 0.10.0
libtpu: 0.0.40
codegen_flags: <defaults>
</compile_context>

<pallas_src>
import jax
import jax.numpy as jnp
from jax.experimental import pallas as pl
from jax.experimental.pallas import tpu as pltpu

LANE = 128
SUBLANE = 8
_MIN_TILE_B = SUBLANE * LANE           # 1024 batch elems -> dense (8,128) tile
_DEFAULT_TILE_B = 64 * _MIN_TILE_B     # 65536 batch elems per grid step


def _round_up(x, m):
    return ((x + m - 1) // m) * m


def glycolysis_ode_kernel(p_ref, y_ref, o_ref):
    # p_ref: (14,) parameters in SMEM (scalar prefetch).
    # y_ref: (7, tile_nb, 128) state block in VMEM.
    # o_ref: (7, tile_nb, 128) derivative block in VMEM.
    J0    = p_ref[0]
    k2    = p_ref[2]
    k3    = p_ref[3]
    k4    = p_ref[4]
    k5    = p_ref[5]
    k6    = p_ref[6]
    k     = p_ref[7]
    kappa = p_ref[8]
    psi   = p_ref[11]
    N     = p_ref[12]
    A     = p_ref[13]

    # Dense (tile_nb, 128) tiles per species (S1 is never read).
    S2 = y_ref[1]
    S3 = y_ref[2]
    S4 = y_ref[3]
    S5 = y_ref[4]
    S6 = y_ref[5]
    S7 = y_ref[6]

    # Factor repeated fluxes once (explicit CSE; VPU-only, memory-bound kernel).
    v1 = k2 * S2 * (N - S5)          # hexokinase-ish flux
    v2 = k3 * S3 * (A - S6)
    v3 = k4 * S4 * S5
    v4 = kappa * (S4 - S7)
    v5 = k6 * S2 * S5

    o_ref[0] = jnp.full_like(S2, J0)          # dS1: constant influx
    o_ref[1] = -v1 - v5                       # dS2
    o_ref[2] = v1 - v2                        # dS3
    o_ref[3] = v2 - v3 - v4                   # dS4
    o_ref[4] = v1 - v3 - v5                   # dS5
    o_ref[5] = 2.0 * v2 - k5 * S6             # dS6
    o_ref[6] = psi * v4 - k * S7              # dS7


def pure_ode_forward(t, y, p0, tile_b=_DEFAULT_TILE_B):
    """Equivalent of pureODE.forward(t, y). t is unused (autonomous ODE)."""
    del t
    y2 = jnp.reshape(y, (-1, 7)).astype(jnp.float32)      # (B, 7)
    B = y2.shape[0]

    # Batch tile: a multiple of (8 sublanes x 128 lanes), no larger than the
    # padded batch.  Padded lanes are zeros (finite, benign) and sliced off.
    tile_b = max(_MIN_TILE_B, (min(tile_b, _round_up(B, _MIN_TILE_B))
                               // _MIN_TILE_B) * _MIN_TILE_B)
    B_pad = _round_up(B, tile_b)
    if B_pad != B:
        y2 = jnp.pad(y2, ((0, B_pad - B), (0, 0)))

    NB = B_pad // LANE
    tile_nb = tile_b // LANE
    grid = (B_pad // tile_b,)

    # (B_pad, 7) -> (7, B_pad) -> (7, NB, 128): species on dim 0, batch folded
    # into dense (sublane, lane) tiles.
    yt = jnp.transpose(y2).reshape(7, NB, LANE)

    bytes_accessed = 2 * 7 * B_pad * 4          # read y + write dy (f32)
    out = pl.pallas_call(
        glycolysis_ode_kernel,
        out_shape=jax.ShapeDtypeStruct((7, NB, LANE), jnp.float32),
        grid_spec=pltpu.PrefetchScalarGridSpec(
            num_scalar_prefetch=1,                          # p0 -> SMEM
            grid=grid,
            in_specs=[
                pl.BlockSpec((7, tile_nb, LANE), lambda i, p: (0, i, 0)),
            ],
            out_specs=pl.BlockSpec((7, tile_nb, LANE), lambda i, p: (0, i, 0)),
        ),
        compiler_params=pltpu.CompilerParams(
            dimension_semantics=("parallel",),              # both TCs on v7x
        ),
        cost_estimate=pl.CostEstimate(
            flops=22 * B_pad, transcendentals=0, bytes_accessed=bytes_accessed),
    )(p0.astype(jnp.float32), yt)

    # (7, NB, 128) -> (7, B_pad) -> (B_pad, 7) -> (B, 1, 7)
    dy = jnp.transpose(out.reshape(7, B_pad))[:B]
    return dy.reshape(-1, 1, 7)


def pure_ode_reference(t, y, p0):
    """Pure-JAX reference mirroring the PyTorch forward (for verification)."""
    del t
    y2 = jnp.reshape(y, (-1, 7)).astype(jnp.float32)
    S2, S3, S4, S5, S6, S7 = (y2[:, i] for i in range(1, 7))
    J0, k2, k3, k4, k5, k6, k, kappa, psi, N, A = (
        p0[0], p0[2], p0[3], p0[4], p0[5], p0[6], p0[7], p0[8], p0[11],
        p0[12], p0[13])
    dS1 = jnp.full_like(S2, J0)
    dS2 = -k2 * S2 * (N - S5) - k6 * S2 * S5
    dS3 = k2 * S2 * (N - S5) - k3 * S3 * (A - S6)
    dS4 = k3 * S3 * (A - S6) - k4 * S4 * S5 - kappa * (S4 - S7)
    dS5 = k2 * S2 * (N - S5) - k4 * S4 * S5 - k6 * S2 * S5
    dS6 = 2.0 * k3 * S3 * (A - S6) - k5 * S6
    dS7 = psi * kappa * (S4 - S7) - k * S7
    return jnp.stack([dS1, dS2, dS3, dS4, dS5, dS6, dS7], axis=1).reshape(-1, 1, 7)


if __name__ == "__main__":
    # Deterministic parameter vector p0 (14 entries, classic glycolysis set):
    # [J0, k1, k2, k3, k4, k5, k6, k, kappa, q, K1, psi, N, A]
    # (k1, q, K1 are unused by this forward, matching the PyTorch module.)
    p0 = jnp.array(
        [2.5, 100.0, 6.0, 16.0, 100.0, 1.28, 12.0, 1.8, 13.0, 4.0, 0.52,
         0.1, 1.0, 4.0],
        dtype=jnp.float32,
    )

    key = jax.random.PRNGKey(0)
    B = 8
    y = jax.random.uniform(key, (B, 1, 7), dtype=jnp.float32,
                           minval=0.1, maxval=2.0)
    t = jnp.float32(0.0)

    out = pure_ode_forward(t, y, p0)
    out = jax.block_until_ready(out)

    ref = pure_ode_reference(t, y, p0)
    assert out.shape == (B, 1, 7), out.shape
    assert jnp.allclose(out, ref, rtol=1e-5, atol=1e-5), "mismatch vs reference"

    # Also exercise a batch that is not a multiple of the tile (padding path).
    B2 = 3000
    y2 = jax.random.uniform(jax.random.PRNGKey(1), (B2, 1, 7),
                            dtype=jnp.float32, minval=0.1, maxval=2.0)
    out2 = jax.block_until_ready(pure_ode_forward(t, y2, p0))
    ref2 = pure_ode_reference(t, y2, p0)
    assert out2.shape == (B2, 1, 7), out2.shape
    assert jnp.allclose(out2, ref2, rtol=1e-5, atol=1e-5), "mismatch (padded)"

    print("KERNEL_OK")
</pallas_src>

<mosaic_0001>
module attributes {stable_mosaic.version = 11 : i64} {
  func.func @glycolysis_ode_kernel(%arg0: i32, %arg1: memref<14xf32, #tpu.memory_space<smem>>, %arg2: memref<7x8x128xf32, #tpu.memory_space<vmem>>, %arg3: memref<7x8x128xf32, #tpu.memory_space<vmem>>) attributes {dimension_semantics = [#tpu.dimension_semantics<parallel>], iteration_bounds = array<i64: 1>, scalar_prefetch = 1 : i64, scratch_operands = 0 : i64, tpu.core_type = #tpu.core_type<tc>, window_params = [{transform_indices = @transform_0, window_bounds = array<i64: 7, 8, 128>}, {transform_indices = @transform_1, window_bounds = array<i64: 7, 8, 128>}]} {
    %c0 = arith.constant 0 : index
    %0 = memref.load %arg1[%c0] : memref<14xf32, #tpu.memory_space<smem>>
    %c2 = arith.constant 2 : index
    %1 = memref.load %arg1[%c2] : memref<14xf32, #tpu.memory_space<smem>>
    %c3 = arith.constant 3 : index
    %2 = memref.load %arg1[%c3] : memref<14xf32, #tpu.memory_space<smem>>
    %c4 = arith.constant 4 : index
    %3 = memref.load %arg1[%c4] : memref<14xf32, #tpu.memory_space<smem>>
    %c5 = arith.constant 5 : index
    %4 = memref.load %arg1[%c5] : memref<14xf32, #tpu.memory_space<smem>>
    %c6 = arith.constant 6 : index
    %5 = memref.load %arg1[%c6] : memref<14xf32, #tpu.memory_space<smem>>
    %c7 = arith.constant 7 : index
    %6 = memref.load %arg1[%c7] : memref<14xf32, #tpu.memory_space<smem>>
    %c8 = arith.constant 8 : index
    %7 = memref.load %arg1[%c8] : memref<14xf32, #tpu.memory_space<smem>>
    %c11 = arith.constant 11 : index
    %8 = memref.load %arg1[%c11] : memref<14xf32, #tpu.memory_space<smem>>
    %c12 = arith.constant 12 : index
    %9 = memref.load %arg1[%c12] : memref<14xf32, #tpu.memory_space<smem>>
    %c13 = arith.constant 13 : index
    %10 = memref.load %arg1[%c13] : memref<14xf32, #tpu.memory_space<smem>>
    %c1 = arith.constant 1 : index
    %c0_0 = arith.constant 0 : index
    %c0_1 = arith.constant 0 : index
    %11 = vector.load %arg2[%c1, %c0_0, %c0_1] : memref<7x8x128xf32, #tpu.memory_space<vmem>>, vector<1x8x128xf32>
    %12 = vector.shape_cast %11 : vector<1x8x128xf32> to vector<8x128xf32>
    %c2_2 = arith.constant 2 : index
    %c0_3 = arith.constant 0 : index
    %c0_4 = arith.constant 0 : index
    %13 = vector.load %arg2[%c2_2, %c0_3, %c0_4] : memref<7x8x128xf32, #tpu.memory_space<vmem>>, vector<1x8x128xf32>
    %14 = vector.shape_cast %13 : vector<1x8x128xf32> to vector<8x128xf32>
    %c3_5 = arith.constant 3 : index
    %c0_6 = arith.constant 0 : index
    %c0_7 = arith.constant 0 : index
    %15 = vector.load %arg2[%c3_5, %c0_6, %c0_7] : memref<7x8x128xf32, #tpu.memory_space<vmem>>, vector<1x8x128xf32>
    %16 = vector.shape_cast %15 : vector<1x8x128xf32> to vector<8x128xf32>
    %c4_8 = arith.constant 4 : index
    %c0_9 = arith.constant 0 : index
    %c0_10 = arith.constant 0 : index
    %17 = vector.load %arg2[%c4_8, %c0_9, %c0_10] : memref<7x8x128xf32, #tpu.memory_space<vmem>>, vector<1x8x128xf32>
    %18 = vector.shape_cast %17 : vector<1x8x128xf32> to vector<8x128xf32>
    %c5_11 = arith.constant 5 : index
    %c0_12 = arith.constant 0 : index
    %c0_13 = arith.constant 0 : index
    %19 = vector.load %arg2[%c5_11, %c0_12, %c0_13] : memref<7x8x128xf32, #tpu.memory_space<vmem>>, vector<1x8x128xf32>
    %20 = vector.shape_cast %19 : vector<1x8x128xf32> to vector<8x128xf32>
    %c6_14 = arith.constant 6 : index
    %c0_15 = arith.constant 0 : index
    %c0_16 = arith.constant 0 : index
    %21 = vector.load %arg2[%c6_14, %c0_15, %c0_16] : memref<7x8x128xf32, #tpu.memory_space<vmem>>, vector<1x8x128xf32>
    %22 = vector.shape_cast %21 : vector<1x8x128xf32> to vector<8x128xf32>
    %23 = vector.broadcast %1 : f32 to vector<8x128xf32>
    %24 = arith.mulf %23, %12 : vector<8x128xf32>
    %25 = vector.broadcast %9 : f32 to vector<8x128xf32>
    %26 = arith.subf %25, %18 : vector<8x128xf32>
    %27 = arith.mulf %24, %26 : vector<8x128xf32>
    %28 = vector.broadcast %2 : f32 to vector<8x128xf32>
    %29 = arith.mulf %28, %14 : vector<8x128xf32>
    %30 = vector.broadcast %10 : f32 to vector<8x128xf32>
    %31 = arith.subf %30, %20 : vector<8x128xf32>
    %32 = arith.mulf %29, %31 : vector<8x128xf32>
    %33 = vector.broadcast %3 : f32 to vector<8x128xf32>
    %34 = arith.mulf %33, %16 : vector<8x128xf32>
    %35 = arith.mulf %34, %18 : vector<8x128xf32>
    %36 = arith.subf %16, %22 : vector<8x128xf32>
    %37 = vector.broadcast %7 : f32 to vector<8x128xf32>
    %38 = arith.mulf %37, %36 : vector<8x128xf32>
    %39 = vector.broadcast %5 : f32 to vector<8x128xf32>
    %40 = arith.mulf %39, %12 : vector<8x128xf32>
    %41 = arith.mulf %40, %18 : vector<8x128xf32>
    %42 = vector.broadcast %0 : f32 to vector<8x128xf32>
    %c0_17 = arith.constant 0 : index
    %c0_18 = arith.constant 0 : index
    %c0_19 = arith.constant 0 : index
    %43 = vector.load %arg3[%c0_17, %c0_18, %c0_19] : memref<7x8x128xf32, #tpu.memory_space<vmem>>, vector<1x8x128xf32>
    %44 = vector.shape_cast %43 : vector<1x8x128xf32> to vector<8x128xf32>
    %45 = vector.shape_cast %42 : vector<8x128xf32> to vector<1x8x128xf32>
    tpu.vector_store %arg3[%c0_17, %c0_18, %c0_19], %45 {strides = array<i32>} : memref<7x8x128xf32, #tpu.memory_space<vmem>>, vector<1x8x128xf32>,
    %cst = arith.constant 0.000000e+00 : f32
    %46 = vector.broadcast %cst : f32 to vector<8x128xf32>
    %47 = arith.subf %46, %27 : vector<8x128xf32>
    %48 = arith.subf %47, %41 : vector<8x128xf32>
    %c1_20 = arith.constant 1 : index
    %c0_21 = arith.constant 0 : index
    %c0_22 = arith.constant 0 : index
    %49 = vector.load %arg3[%c1_20, %c0_21, %c0_22] : memref<7x8x128xf32, #tpu.memory_space<vmem>>, vector<1x8x128xf32>
    %50 = vector.shape_cast %49 : vector<1x8x128xf32> to vector<8x128xf32>
    %51 = vector.shape_cast %48 : vector<8x128xf32> to vector<1x8x128xf32>
    tpu.vector_store %arg3[%c1_20, %c0_21, %c0_22], %51 {strides = array<i32>} : memref<7x8x128xf32, #tpu.memory_space<vmem>>, vector<1x8x128xf32>,
    %52 = arith.subf %27, %32 : vector<8x128xf32>
    %c2_23 = arith.constant 2 : index
    %c0_24 = arith.constant 0 : index
    %c0_25 = arith.constant 0 : index
    %53 = vector.load %arg3[%c2_23, %c0_24, %c0_25] : memref<7x8x128xf32, #tpu.memory_space<vmem>>, vector<1x8x128xf32>
    %54 = vector.shape_cast %53 : vector<1x8x128xf32> to vector<8x128xf32>
    %55 = vector.shape_cast %52 : vector<8x128xf32> to vector<1x8x128xf32>
    tpu.vector_store %arg3[%c2_23, %c0_24, %c0_25], %55 {strides = array<i32>} : memref<7x8x128xf32, #tpu.memory_space<vmem>>, vector<1x8x128xf32>,
    %56 = arith.subf %32, %35 : vector<8x128xf32>
    %57 = arith.subf %56, %38 : vector<8x128xf32>
    %c3_26 = arith.constant 3 : index
    %c0_27 = arith.constant 0 : index
    %c0_28 = arith.constant 0 : index
    %58 = vector.load %arg3[%c3_26, %c0_27, %c0_28] : memref<7x8x128xf32, #tpu.memory_space<vmem>>, vector<1x8x128xf32>
    %59 = vector.shape_cast %58 : vector<1x8x128xf32> to vector<8x128xf32>
    %60 = vector.shape_cast %57 : vector<8x128xf32> to vector<1x8x128xf32>
    tpu.vector_store %arg3[%c3_26, %c0_27, %c0_28], %60 {strides = array<i32>} : memref<7x8x128xf32, #tpu.memory_space<vmem>>, vector<1x8x128xf32>,
    %61 = arith.subf %27, %35 : vector<8x128xf32>
    %62 = arith.subf %61, %41 : vector<8x128xf32>
    %c4_29 = arith.constant 4 : index
    %c0_30 = arith.constant 0 : index
    %c0_31 = arith.constant 0 : index
    %63 = vector.load %arg3[%c4_29, %c0_30, %c0_31] : memref<7x8x128xf32, #tpu.memory_space<vmem>>, vector<1x8x128xf32>
    %64 = vector.shape_cast %63 : vector<1x8x128xf32> to vector<8x128xf32>
    %65 = vector.shape_cast %62 : vector<8x128xf32> to vector<1x8x128xf32>
    tpu.vector_store %arg3[%c4_29, %c0_30, %c0_31], %65 {strides = array<i32>} : memref<7x8x128xf32, #tpu.memory_space<vmem>>, vector<1x8x128xf32>,
    %cst_32 = arith.constant 2.000000e+00 : f32
    %66 = vector.broadcast %cst_32 : f32 to vector<8x128xf32>
    %67 = arith.mulf %66, %32 : vector<8x128xf32>
    %68 = vector.broadcast %4 : f32 to vector<8x128xf32>
    %69 = arith.mulf %68, %20 : vector<8x128xf32>
    %70 = arith.subf %67, %69 : vector<8x128xf32>
    %c5_33 = arith.constant 5 : index
    %c0_34 = arith.constant 0 : index
    %c0_35 = arith.constant 0 : index
    %71 = vector.load %arg3[%c5_33, %c0_34, %c0_35] : memref<7x8x128xf32, #tpu.memory_space<vmem>>, vector<1x8x128xf32>
    %72 = vector.shape_cast %71 : vector<1x8x128xf32> to vector<8x128xf32>
    %73 = vector.shape_cast %70 : vector<8x128xf32> to vector<1x8x128xf32>
    tpu.vector_store %arg3[%c5_33, %c0_34, %c0_35], %73 {strides = array<i32>} : memref<7x8x128xf32, #tpu.memory_space<vmem>>, vector<1x8x128xf32>,
    %74 = vector.broadcast %8 : f32 to vector<8x128xf32>
    %75 = arith.mulf %74, %38 : vector<8x128xf32>
    %76 = vector.broadcast %6 : f32 to vector<8x128xf32>
    %77 = arith.mulf %76, %22 : vector<8x128xf32>
    %78 = arith.subf %75, %77 : vector<8x128xf32>
    %c6_36 = arith.constant 6 : index
    %c0_37 = arith.constant 0 : index
    %c0_38 = arith.constant 0 : index
    %79 = vector.load %arg3[%c6_36, %c0_37, %c0_38] : memref<7x8x128xf32, #tpu.memory_space<vmem>>, vector<1x8x128xf32>
    %80 = vector.shape_cast %79 : vector<1x8x128xf32> to vector<8x128xf32>
    %81 = vector.shape_cast %78 : vector<8x128xf32> to vector<1x8x128xf32>
    tpu.vector_store %arg3[%c6_36, %c0_37, %c0_38], %81 {strides = array<i32>} : memref<7x8x128xf32, #tpu.memory_space<vmem>>, vector<1x8x128xf32>,
    return
  }
  func.func @transform_0(%arg0: i32, %arg1: memref<14xf32, #tpu.memory_space<smem>>) -> (i32, i32, i32) {
    %c0_i32 = arith.constant 0 : i32
    %c0_i32_0 = arith.constant 0 : i32
    %c0_i32_1 = arith.constant 0 : i32
    return %c0_i32, %arg0, %c0_i32_0 : i32, i32, i32
  }
  func.func @transform_1(%arg0: i32, %arg1: memref<14xf32, #tpu.memory_space<smem>>) -> (i32, i32, i32) {
    %c0_i32 = arith.constant 0 : i32
    %c0_i32_0 = arith.constant 0 : i32
    %c0_i32_1 = arith.constant 0 : i32
    return %c0_i32, %arg0, %c0_i32_0 : i32, i32, i32
  }
}

</mosaic_0001>

<llo_original>
// kernel: tpu_custom_call.1
$region0: #{tpu_custom_call.1}
  #allocation0 [shape = 'u32[]', space=smem, size = 0x4, offset = 0x4, fixed_abs, tag = 'smem constant byte address 0x4 - core index']
  #allocation1 [shape = 'u32[72,128]{1,0:T(1,128)}', space=vmem, size = 0x9000, scoped, tag = 'internal scratch']
  #allocation2 [shape = 's32[1]{0}', space=sflag, size = 0x4, scoped, tag = 'scoped memory for tpu_custom_call.1']
  #allocation3 [shape = 'u8[512]{0}', space=smem, size = 0x200, scoped, tag = 'prefetched SMEM operand 0']
  %s0 = inlined_call_operand.hbm [shape: f32[14], index: 0, kind: input, shape index: {}]
  %s1 = inlined_call_operand.hbm [shape: f32[7,8,128], index: 1, kind: input, shape index: {}]
  %s2 = inlined_call_operand.hbm [shape: f32[7,8,128], index: 2, kind: output, shape index: {}]
  %s3 = sld [smem:[#allocation0]]
  $region18: #{tpu_custom_call.1} parent=0
    _
  %s5 = ssub.s32 1, %s3
  %s6 = scalar_select 0, %s5, %s3
  %s8 = sshll.u32 %s0, 4
  %s9 = int_to_ptr.hbm [resolvable:$true] %s8
  %11 = dma.hbm_to_smem %s9, 16, [#allocation3], [#allocation2]
  %13 = dma.done [#allocation2], 16
  %14 = sfence
  $region1: #{tpu_custom_call.1} parent=0
    #allocation4 [shape = 'u8[28672]{0}', space=vmem, size = 0x7000, scoped, tag = 'input window, operand 1, single buffered']
    #allocation5 [shape = 's32[1]{0}', space=sflag, size = 0x4, scoped, tag = 'scoped memory for tpu_custom_call.1']
    #allocation6 [shape = 's32[1]{0}', space=sflag, size = 0x4, scoped, tag = 'scoped memory for tpu_custom_call.1']
    #allocation7 [shape = 'u8[28672]{0}', space=vmem, size = 0x7000, scoped, tag = 'output window, operand 0, single buffered']
    %15 = vsyncpa [#allocation5], 0
    %16 = vsyncpa [#allocation6], 0
    // Predicated region
    $region2: #{tpu_custom_call.1} parent=1 // pred_check
      _
    $region3: #{tpu_custom_call.1} parent=1 // pred_check_branch
      %18 = sbr.rel (0) target = $region5
    $region4: #{tpu_custom_call.1} parent=1 // pred_region
      %20 = vsyncadd [#allocation5], 0
      %s21 = sshll.u32 %s1, 4
      %s22 = int_to_ptr.hbm [resolvable:$true] %s21
      %s23 = sshll.u32 [#allocation4], 4
      %s24 = int_to_ptr.vmem [resolvable:$true] %s23
      %29 = dma.hbm_to_vmem [thread:$0]  %s22, 896, %s24, [#allocation5], 128, 128, 8
    $region5: #{tpu_custom_call.1} parent=1 // pred_fallthru
      _
    // Predicated region
    $region6: #{tpu_custom_call.1} parent=1 // pred_check
      _
    $region7: #{tpu_custom_call.1} parent=1 // pred_check_branch
      %31 = sbr.rel (0) target = $region9
    $region8: #{tpu_custom_call.1} parent=1 // pred_region
      %33 = dma.done [#allocation5], 896
    $region9: #{tpu_custom_call.1} parent=1 // pred_fallthru
      _
    %s34 = sld [smem:[#allocation3]]
    %s35 = sld [smem:[#allocation3 + $0x2]]
    %s36 = sld [smem:[#allocation3 + $0x3]]
    %s37 = sld [smem:[#allocation3 + $0x4]]
    %s38 = sld [smem:[#allocation3 + $0x5]]
    %s39 = sld [smem:[#allocation3 + $0x6]]
    %s40 = sld [smem:[#allocation3 + $0x7]]
    %s41 = sld [smem:[#allocation3 + $0x8]]
    %s42 = sld [smem:[#allocation3 + $0xb]]
    %s43 = sld [smem:[#allocation3 + $0xc]]
    %s44 = sld [smem:[#allocation3 + $0xd]]
    %s45 = scalar_lea.vmem [#allocation4], 8
    %v46 = vld [vmem:[%s45] sm:$0xff]
    %s47 = scalar_lea.vmem [#allocation4], 16
    %v48 = vld [vmem:[%s47] sm:$0xff]
    %s49 = scalar_lea.vmem [#allocation4], 24
    %v50 = vld [vmem:[%s49] sm:$0xff]
    %s51 = scalar_lea.vmem [#allocation4], 32
    %v52 = vld [vmem:[%s51] sm:$0xff]
    %s53 = scalar_lea.vmem [#allocation4], 40
    %v54 = vld [vmem:[%s53] sm:$0xff]
    %s55 = scalar_lea.vmem [#allocation4], 48
    %v56 = vld [vmem:[%s55] sm:$0xff]
    %v57 = vstv %s35
    %v58 = vmul.f32 %v57, %v46
    %v59 = vstv %s43
    %v60 = vsub.f32 %v59, %v52
    %v61 = vmul.f32 %v58, %v60
    %v62 = vstv %s36
    %v63 = vmul.f32 %v62, %v48
    %v64 = vstv %s44
    %v65 = vsub.f32 %v64, %v54
    %v66 = vmul.f32 %v63, %v65
    %v67 = vstv %s37
    %v68 = vmul.f32 %v67, %v50
    %v69 = vmul.f32 %v68, %v52
    %v70 = vsub.f32 %v50, %v56
    %v71 = vstv %s41
    %v72 = vmul.f32 %v71, %v70
    %v73 = vstv %s39
    %v74 = vmul.f32 %v73, %v46
    %v75 = vmul.f32 %v74, %v52
    %v76 = vstv %s34
    %77 = vst [vmem:[#allocation7] sm:$0xff] %v76
    %v78 = vsub.f32 0.0, %v61
    %v79 = vsub.f32 %v78, %v75
    %s80 = scalar_lea.vmem [#allocation7], 8
    %81 = vst [vmem:[%s80] sm:$0xff] %v79
    %v82 = vsub.f32 %v61, %v66
    %s83 = scalar_lea.vmem [#allocation7], 16
    %84 = vst [vmem:[%s83] sm:$0xff] %v82
    %v85 = vsub.f32 %v66, %v69
    %v86 = vsub.f32 %v85, %v72
    %s87 = scalar_lea.vmem [#allocation7], 24
    %88 = vst [vmem:[%s87] sm:$0xff] %v86
    %v89 = vsub.f32 %v61, %v69
    %v90 = vsub.f32 %v89, %v75
    %s91 = scalar_lea.vmem [#allocation7], 32
    %92 = vst [vmem:[%s91] sm:$0xff] %v90
    %v93 = vmul.f32 %v66, 2.0
    %v94 = vstv %s38
    %v95 = vmul.f32 %v94, %v54
    %v96 = vsub.f32 %v93, %v95
    %s97 = scalar_lea.vmem [#allocation7], 40
    %98 = vst [vmem:[%s97] sm:$0xff] %v96
    %v99 = vstv %s42
    %v100 = vmul.f32 %v99, %v72
    %v101 = vstv %s40
    %v102 = vmul.f32 %v101, %v56
    %v103 = vsub.f32 %v100, %v102
    %s104 = scalar_lea.vmem [#allocation7], 48
    %105 = vst [vmem:[%s104] sm:$0xff] %v103
    // Predicated region
    $region10: #{tpu_custom_call.1} parent=1 // pred_check
      _
    $region11: #{tpu_custom_call.1} parent=1 // pred_check_branch
      %107 = sbr.rel (0) target = $region13
    $region12: #{tpu_custom_call.1} parent=1 // pred_region
      %109 = vsyncadd [#allocation6], 0
      %s110 = sshll.u32 [#allocation7], 4
      %s111 = int_to_ptr.vmem [resolvable:$true] %s110
      %s112 = sshll.u32 %s2, 4
      %s113 = int_to_ptr.hbm [resolvable:$true] %s112
      %118 = dma.vmem_to_hbm [thread:$0]  %s111, 896, %s113, [#allocation6], 128, 128, 8
    $region13: #{tpu_custom_call.1} parent=1 // pred_fallthru
      _
    // Predicated region
    $region14: #{tpu_custom_call.1} parent=1 // pred_check
      _
    $region15: #{tpu_custom_call.1} parent=1 // pred_check_branch
      %120 = sbr.rel (0) target = $region17
    $region16: #{tpu_custom_call.1} parent=1 // pred_region
      %122 = dma.done [#allocation6], 896
    $region17: #{tpu_custom_call.1} parent=1 // pred_fallthru
      _
    %123 = vsyncpa [#allocation5], 1
    %124 = vsyncpa [#allocation6], 1

</llo_original>
